<compile_context>
chip_gen: v7x
topology: tpu7x:2x2x1
jax: 0.10.0
libtpu: 0.0.40
codegen_flags: <defaults>
</compile_context>

<pallas_src>
import math

import jax
import jax.numpy as jnp
from jax.experimental import pallas as pl
from jax.experimental.pallas import tpu as pltpu

EPS = 1e-5  # nn.InstanceNorm1d default eps


def xception_kernel(x_ref, w0_ref, w1_ref, b_ref, out_ref):
    x = x_ref[...]                                   # (b*C_in, L)
    L = x.shape[-1]

    # Hoisted lane-boundary masks (reused by both DSC blocks).
    lane = jax.lax.broadcasted_iota(jnp.int32, (1, L), 1)
    not_first = lane != 0
    not_last = lane != (L - 1)

    def relu_norm_taps(h):
        # ReLU
        h = jnp.maximum(h, 0.0)
        # InstanceNorm1d (no affine, biased variance), two-pass/centered form.
        mean = jnp.mean(h, axis=-1, keepdims=True)
        cen = h - mean
        var = jnp.mean(cen * cen, axis=-1, keepdims=True)
        hn = cen * jax.lax.rsqrt(var + EPS)
        # Depthwise halo taps via XLU lane rolls + masked boundaries (pad=1 behaviour).
        hm1 = jnp.where(not_first, pltpu.roll(hn, shift=1, axis=1), 0.0)      # h[l-1]
        hp1 = jnp.where(not_last, pltpu.roll(hn, shift=L - 1, axis=1), 0.0)   # h[l+1]
        # Sublane-stack the taps; the 3-tap conv is folded into the matmul weight.
        return jnp.concatenate([hm1, hn, hp1], axis=0)                        # (3*rows, L)

    # Block 0: depthwise+pointwise fused into one MXU contraction.
    s0 = relu_norm_taps(x)                                                    # (3*b*C_in, L)
    h1 = jnp.dot(w0_ref[...], s0, preferred_element_type=jnp.float32) + b_ref[0]

    # Block 1 + skip 1x1 conv fused into one MXU contraction.
    s1 = relu_norm_taps(h1)                                                   # (3*b*C_out, L)
    s1x = jnp.concatenate([s1, x], axis=0)                                    # (3*b*C_out + b*C_in, L)
    out_ref[...] = jnp.dot(w1_ref[...], s1x,
                           preferred_element_type=jnp.float32) + b_ref[1]


def _pick_b_tile(n, c_in, c_out, row_cap=256):
    """Choose (b_tile, n_pad): sublane-aligned rows, kron rows <= row_cap, >=2 grid
    steps when possible (v7x dual-TC / megacore)."""
    # Smallest batch multiple giving 8-aligned row counts for both C_in and C_out tiles.
    b_req = math.lcm(8 // math.gcd(8, c_in), 8 // math.gcd(8, c_out))
    n_pad = pl.cdiv(n, b_req) * b_req
    cands = [b for b in range(b_req, n_pad + 1, b_req)
             if n_pad % b == 0 and b * max(c_in, c_out) <= row_cap]
    if not cands:
        cands = [b_req]
    multi = [b for b in cands if n_pad // b >= 2]   # prefer >= 2 grid steps
    return (max(multi) if multi else max(cands)), n_pad


def xception_module_1d(x, params, pooling_stride=1, b_tile=None):
    assert pooling_stride == 1, "pooling_stride > 1 (AvgPool + strided skip) not implemented"
    n, c_in, length = x.shape
    c_out = params["pw_w0"].shape[0]
    f32 = jnp.float32

    if b_tile is None:
        b_tile, n_pad = _pick_b_tile(n, c_in, c_out)
    else:
        n_pad = pl.cdiv(n, b_tile) * b_tile
    bc_in, bc_out = b_tile * c_in, b_tile * c_out

    # Zero-pad batch if needed so every tile has 8-aligned sublane counts.
    if n_pad > n:
        x = jnp.pad(x, ((0, n_pad - n), (0, 0), (0, 0)))
    # Fold batch onto the sublane (row) axis: free row-major reshape in HBM.
    x2 = x.reshape(n_pad * c_in, length).astype(f32)

    def tile_rows(a):                       # (C, k) -> (b_tile*C, k)
        return jnp.tile(a.astype(f32), (b_tile, 1))

    eye = jnp.eye(b_tile, dtype=f32)
    pw0_blk = jnp.kron(eye, params["pw_w0"].astype(f32))     # (bc_out, bc_in)
    pw1_blk = jnp.kron(eye, params["pw_w1"].astype(f32))     # (bc_out, bc_out)
    sk_blk = jnp.kron(eye, params["sk_w"].astype(f32))       # (bc_out, bc_in)

    def fuse_dw(pw_blk, dw_w):
        # Fold the 3 depthwise taps into the pointwise weight:
        # [pw*diag(w_-1) | pw*diag(w_0) | pw*diag(w_+1)]
        taps = tile_rows(dw_w)                                # (rows_in, 3)
        return jnp.concatenate([pw_blk * taps[:, 0][None, :],
                                pw_blk * taps[:, 1][None, :],
                                pw_blk * taps[:, 2][None, :]], axis=1)

    w0 = fuse_dw(pw0_blk, params["dw_w0"])                    # (bc_out, 3*bc_in)
    # Second block fused with the skip 1x1 conv.
    w1 = jnp.concatenate([fuse_dw(pw1_blk, params["dw_w1"]), sk_blk],
                         axis=1)                              # (bc_out, 3*bc_out + bc_in)
    # Biases: dw bias folded through the pointwise conv; pw1/skip biases pre-summed.
    b0 = pw0_blk @ tile_rows(params["dw_b0"]) + tile_rows(params["pw_b0"])    # (bc_out, 1)
    b1 = (pw1_blk @ tile_rows(params["dw_b1"]) + tile_rows(params["pw_b1"])
          + tile_rows(params["sk_b"]))                                        # (bc_out, 1)
    bpack = jnp.stack([b0, b1])                               # (2, bc_out, 1)

    def const_spec(arr):
        # Constant block index across the grid -> Pallas elides re-DMA between steps.
        return pl.BlockSpec(arr.shape, lambda i: (0,) * arr.ndim)

    out2 = pl.pallas_call(
        xception_kernel,
        out_shape=jax.ShapeDtypeStruct((n_pad * c_out, length), f32),
        grid_spec=pltpu.PrefetchScalarGridSpec(
            num_scalar_prefetch=0,
            grid=(n_pad // b_tile,),
            in_specs=[pl.BlockSpec((bc_in, length), lambda i: (i, 0)),
                      const_spec(w0), const_spec(w1), const_spec(bpack)],
            out_specs=pl.BlockSpec((bc_out, length), lambda i: (i, 0)),
        ),
        compiler_params=pltpu.CompilerParams(dimension_semantics=("parallel",)),
    )(x2, w0, w1, bpack)

    return out2.reshape(n_pad, c_out, length)[:n]


# --------------------- pure-JAX reference (PyTorch-faithful) ---------------------
def _ref_dsc(h, dw_w, dw_b, pw_w, pw_b):
    _, _, length = h.shape
    h = jnp.maximum(h, 0.0)
    mean = jnp.mean(h, axis=-1, keepdims=True)
    var = jnp.mean((h - mean) ** 2, axis=-1, keepdims=True)
    h = (h - mean) / jnp.sqrt(var + EPS)
    hpad = jnp.pad(h, ((0, 0), (0, 0), (1, 1)))
    y = (dw_w[None, :, 0:1] * hpad[:, :, 0:length]
         + dw_w[None, :, 1:2] * hpad[:, :, 1:length + 1]
         + dw_w[None, :, 2:3] * hpad[:, :, 2:length + 2]
         + dw_b[None, :, 0:1])
    return jnp.einsum("oc,ncl->nol", pw_w, y) + pw_b[None, :, 0:1]


def xception_reference(x, p):
    h = _ref_dsc(x, p["dw_w0"], p["dw_b0"], p["pw_w0"], p["pw_b0"])
    h = _ref_dsc(h, p["dw_w1"], p["dw_b1"], p["pw_w1"], p["pw_b1"])
    skip = jnp.einsum("oc,ncl->nol", p["sk_w"], x) + p["sk_b"][None, :, 0:1]
    return h + skip


# --------------------------------- main ---------------------------------
if __name__ == "__main__":
    # Module config: in_channels=4, out_channels=8, n_modules=2, kernel_size=3,
    # pooling_stride=1  (skip path = 1x1 conv since 4 != 8)
    N, C_IN, C_OUT, L = 2, 4, 8, 128

    key = jax.random.PRNGKey(0)
    keys = jax.random.split(key, 11)
    s = 0.1
    params = {
        # module 0: depthwise (C_IN,1,3) stored as (C_IN,3); pointwise (C_OUT,C_IN,1) as (C_OUT,C_IN)
        "dw_w0": s * jax.random.normal(keys[0], (C_IN, 3), jnp.float32),
        "dw_b0": s * jax.random.normal(keys[1], (C_IN, 1), jnp.float32),
        "pw_w0": s * jax.random.normal(keys[2], (C_OUT, C_IN), jnp.float32),
        "pw_b0": s * jax.random.normal(keys[3], (C_OUT, 1), jnp.float32),
        # module 1: in_channels == out_channels == C_OUT
        "dw_w1": s * jax.random.normal(keys[4], (C_OUT, 3), jnp.float32),
        "dw_b1": s * jax.random.normal(keys[5], (C_OUT, 1), jnp.float32),
        "pw_w1": s * jax.random.normal(keys[6], (C_OUT, C_OUT), jnp.float32),
        "pw_b1": s * jax.random.normal(keys[7], (C_OUT, 1), jnp.float32),
        # skip 1x1 conv
        "sk_w": s * jax.random.normal(keys[8], (C_OUT, C_IN), jnp.float32),
        "sk_b": s * jax.random.normal(keys[9], (C_OUT, 1), jnp.float32),
    }

    x = jax.random.normal(keys[10], (N, C_IN, L), jnp.float32)

    out = jax.block_until_ready(xception_module_1d(x, params))

    ref = xception_reference(x, params)
    assert out.shape == (N, C_OUT, L)
    assert jnp.allclose(out, ref, atol=1e-4, rtol=1e-4), "mismatch vs reference"

    print("KERNEL_OK")
</pallas_src>

<mosaic_0001>
module attributes {stable_mosaic.version = 11 : i64} {
  func.func @xception_kernel(%arg0: i32, %arg1: memref<8x128xf32, #tpu.memory_space<vmem>>, %arg2: memref<16x24xf32, #tpu.memory_space<vmem>>, %arg3: memref<16x56xf32, #tpu.memory_space<vmem>>, %arg4: memref<2x16x1xf32, #tpu.memory_space<vmem>>, %arg5: memref<16x128xf32, #tpu.memory_space<vmem>>) attributes {dimension_semantics = [#tpu.dimension_semantics<parallel>], iteration_bounds = array<i64: 1>, scalar_prefetch = 0 : i64, scratch_operands = 0 : i64, tpu.core_type = #tpu.core_type<tc>, window_params = [{transform_indices = @transform_0, window_bounds = array<i64: 8, 128>}, {pipeline_mode = #tpu.pipeline_mode<synchronous>, transform_indices = @transform_1, window_bounds = array<i64: 16, 24>}, {pipeline_mode = #tpu.pipeline_mode<synchronous>, transform_indices = @transform_2, window_bounds = array<i64: 16, 56>}, {pipeline_mode = #tpu.pipeline_mode<synchronous>, transform_indices = @transform_3, window_bounds = array<i64: 2, 16, 1>}, {transform_indices = @transform_4, window_bounds = array<i64: 16, 128>}]} {
    %c0 = arith.constant 0 : index
    %c0_0 = arith.constant 0 : index
    %0 = vector.load %arg1[%c0, %c0_0] : memref<8x128xf32, #tpu.memory_space<vmem>>, vector<8x128xf32>
    %1 = tpu.iota {dimensions = array<i32: 1>} : vector<1x128xi32>
    %c0_i32 = arith.constant 0 : i32
    %2 = vector.broadcast %c0_i32 : i32 to vector<1x128xi32>
    %3 = arith.cmpi ne, %1, %2 : vector<1x128xi32>
    %c127_i32 = arith.constant 127 : i32
    %4 = vector.broadcast %c127_i32 : i32 to vector<1x128xi32>
    %5 = arith.cmpi ne, %1, %4 : vector<1x128xi32>
    %cst = arith.constant 0.000000e+00 : f32
    %6 = vector.broadcast %cst : f32 to vector<8x128xf32>
    %7 = arith.maximumf %0, %6 : vector<8x128xf32>
    %cst_1 = arith.constant dense<0.000000e+00> : vector<8xf32>
    %8 = vector.multi_reduction <add>, %7, %cst_1 [1] : vector<8x128xf32> to vector<8xf32>
    %9 = vector.shape_cast %8 : vector<8xf32> to vector<8x1xf32>
    %cst_2 = arith.constant 1.280000e+02 : f32
    %10 = vector.broadcast %cst_2 : f32 to vector<8x1xf32>
    %11 = arith.divf %9, %10 : vector<8x1xf32>
    %12 = vector.broadcast %11 : vector<8x1xf32> to vector<8x128xf32>
    %13 = arith.subf %7, %12 : vector<8x128xf32>
    %14 = arith.mulf %13, %13 : vector<8x128xf32>
    %cst_3 = arith.constant dense<0.000000e+00> : vector<8xf32>
    %15 = vector.multi_reduction <add>, %14, %cst_3 [1] : vector<8x128xf32> to vector<8xf32>
    %16 = vector.shape_cast %15 : vector<8xf32> to vector<8x1xf32>
    %cst_4 = arith.constant 1.280000e+02 : f32
    %17 = vector.broadcast %cst_4 : f32 to vector<8x1xf32>
    %18 = arith.divf %16, %17 : vector<8x1xf32>
    %cst_5 = arith.constant 9.99999974E-6 : f32
    %19 = vector.broadcast %cst_5 : f32 to vector<8x1xf32>
    %20 = arith.addf %18, %19 : vector<8x1xf32>
    %21 = math.rsqrt %20 : vector<8x1xf32>
    %22 = vector.broadcast %21 : vector<8x1xf32> to vector<8x128xf32>
    %23 = arith.mulf %13, %22 : vector<8x128xf32>
    %c1_i32 = arith.constant 1 : i32
    %24 = tpu.dynamic_rotate %23 by %c1_i32 dim 1 : vector<8x128xf32>, i32 -> vector<8x128xf32>
    %cst_6 = arith.constant 0.000000e+00 : f32
    %25 = vector.shape_cast %3 : vector<1x128xi1> to vector<1x128xi1>
    %26 = vector.broadcast %25 : vector<1x128xi1> to vector<8x128xi1>
    %27 = vector.broadcast %cst_6 : f32 to vector<8x128xf32>
    %28 = arith.select %26, %24, %27 : vector<8x128xi1>, vector<8x128xf32>
    %c127_i32_7 = arith.constant 127 : i32
    %29 = tpu.dynamic_rotate %23 by %c127_i32_7 dim 1 : vector<8x128xf32>, i32 -> vector<8x128xf32>
    %cst_8 = arith.constant 0.000000e+00 : f32
    %30 = vector.shape_cast %5 : vector<1x128xi1> to vector<1x128xi1>
    %31 = vector.broadcast %30 : vector<1x128xi1> to vector<8x128xi1>
    %32 = vector.broadcast %cst_8 : f32 to vector<8x128xf32>
    %33 = arith.select %31, %29, %32 : vector<8x128xi1>, vector<8x128xf32>
    %34 = tpu.concatenate %28, %23, %33 in 0 : vector<8x128xf32>, vector<8x128xf32>, vector<8x128xf32> -> vector<24x128xf32>
    %c0_9 = arith.constant 0 : index
    %c0_10 = arith.constant 0 : index
    %35 = vector.load %arg2[%c0_9, %c0_10] : memref<16x24xf32, #tpu.memory_space<vmem>>, vector<16x24xf32>
    %cst_11 = arith.constant dense<0.000000e+00> : vector<16x128xf32>
    %36 = tpu.matmul %35, %34, %cst_11 {dimension_numbers = #tpu.dot_dimension_numbers<[1], [0], [0], [1], [0, 0, 1, 1], [], []>} : vector<16x24xf32>, vector<24x128xf32>, vector<16x128xf32> -> vector<16x128xf32>
    %c0_12 = arith.constant 0 : index
    %c0_13 = arith.constant 0 : index
    %c0_14 = arith.constant 0 : index
    %37 = vector.load %arg4[%c0_12, %c0_13, %c0_14] : memref<2x16x1xf32, #tpu.memory_space<vmem>>, vector<1x16x1xf32>
    %38 = vector.shape_cast %37 : vector<1x16x1xf32> to vector<16x1xf32>
    %39 = vector.broadcast %38 : vector<16x1xf32> to vector<16x128xf32>
    %40 = arith.addf %36, %39 : vector<16x128xf32>
    %cst_15 = arith.constant 0.000000e+00 : f32
    %41 = vector.broadcast %cst_15 : f32 to vector<16x128xf32>
    %42 = arith.maximumf %40, %41 : vector<16x128xf32>
    %cst_16 = arith.constant dense<0.000000e+00> : vector<16xf32>
    %43 = vector.multi_reduction <add>, %42, %cst_16 [1] : vector<16x128xf32> to vector<16xf32>
    %44 = vector.shape_cast %43 : vector<16xf32> to vector<16x1xf32>
    %cst_17 = arith.constant 1.280000e+02 : f32
    %45 = vector.broadcast %cst_17 : f32 to vector<16x1xf32>
    %46 = arith.divf %44, %45 : vector<16x1xf32>
    %47 = vector.broadcast %46 : vector<16x1xf32> to vector<16x128xf32>
    %48 = arith.subf %42, %47 : vector<16x128xf32>
    %49 = arith.mulf %48, %48 : vector<16x128xf32>
    %cst_18 = arith.constant dense<0.000000e+00> : vector<16xf32>
    %50 = vector.multi_reduction <add>, %49, %cst_18 [1] : vector<16x128xf32> to vector<16xf32>
    %51 = vector.shape_cast %50 : vector<16xf32> to vector<16x1xf32>
    %cst_19 = arith.constant 1.280000e+02 : f32
    %52 = vector.broadcast %cst_19 : f32 to vector<16x1xf32>
    %53 = arith.divf %51, %52 : vector<16x1xf32>
    %cst_20 = arith.constant 9.99999974E-6 : f32
    %54 = vector.broadcast %cst_20 : f32 to vector<16x1xf32>
    %55 = arith.addf %53, %54 : vector<16x1xf32>
    %56 = math.rsqrt %55 : vector<16x1xf32>
    %57 = vector.broadcast %56 : vector<16x1xf32> to vector<16x128xf32>
    %58 = arith.mulf %48, %57 : vector<16x128xf32>
    %c1_i32_21 = arith.constant 1 : i32
    %59 = tpu.dynamic_rotate %58 by %c1_i32_21 dim 1 : vector<16x128xf32>, i32 -> vector<16x128xf32>
    %cst_22 = arith.constant 0.000000e+00 : f32
    %60 = vector.shape_cast %3 : vector<1x128xi1> to vector<1x128xi1>
    %61 = vector.broadcast %60 : vector<1x128xi1> to vector<16x128xi1>
    %62 = vector.broadcast %cst_22 : f32 to vector<16x128xf32>
    %63 = arith.select %61, %59, %62 : vector<16x128xi1>, vector<16x128xf32>
    %c127_i32_23 = arith.constant 127 : i32
    %64 = tpu.dynamic_rotate %58 by %c127_i32_23 dim 1 : vector<16x128xf32>, i32 -> vector<16x128xf32>
    %cst_24 = arith.constant 0.000000e+00 : f32
    %65 = vector.shape_cast %5 : vector<1x128xi1> to vector<1x128xi1>
    %66 = vector.broadcast %65 : vector<1x128xi1> to vector<16x128xi1>
    %67 = vector.broadcast %cst_24 : f32 to vector<16x128xf32>
    %68 = arith.select %66, %64, %67 : vector<16x128xi1>, vector<16x128xf32>
    %69 = tpu.concatenate %63, %58, %68 in 0 : vector<16x128xf32>, vector<16x128xf32>, vector<16x128xf32> -> vector<48x128xf32>
    %70 = tpu.concatenate %69, %0 in 0 : vector<48x128xf32>, vector<8x128xf32> -> vector<56x128xf32>
    %c0_25 = arith.constant 0 : index
    %c0_26 = arith.constant 0 : index
    %71 = vector.load %arg3[%c0_25, %c0_26] : memref<16x56xf32, #tpu.memory_space<vmem>>, vector<16x56xf32>
    %cst_27 = arith.constant dense<0.000000e+00> : vector<16x128xf32>
    %72 = tpu.matmul %71, %70, %cst_27 {dimension_numbers = #tpu.dot_dimension_numbers<[1], [0], [0], [1], [0, 0, 1, 1], [], []>} : vector<16x56xf32>, vector<56x128xf32>, vector<16x128xf32> -> vector<16x128xf32>
    %c1 = arith.constant 1 : index
    %c0_28 = arith.constant 0 : index
    %c0_29 = arith.constant 0 : index
    %73 = vector.load %arg4[%c1, %c0_28, %c0_29] : memref<2x16x1xf32, #tpu.memory_space<vmem>>, vector<1x16x1xf32>
    %74 = vector.shape_cast %73 : vector<1x16x1xf32> to vector<16x1xf32>
    %75 = vector.broadcast %74 : vector<16x1xf32> to vector<16x128xf32>
    %76 = arith.addf %72, %75 : vector<16x128xf32>
    %c0_30 = arith.constant 0 : index
    %c0_31 = arith.constant 0 : index
    %77 = vector.load %arg5[%c0_30, %c0_31] : memref<16x128xf32, #tpu.memory_space<vmem>>, vector<16x128xf32>
    tpu.vector_store %arg5[%c0_30, %c0_31], %76 {strides = array<i32>} : memref<16x128xf32, #tpu.memory_space<vmem>>, vector<16x128xf32>,
    return
  }
  func.func @transform_0(%arg0: i32) -> (i32, i32) {
    %c0_i32 = arith.constant 0 : i32
    %c0_i32_0 = arith.constant 0 : i32
    return %arg0, %c0_i32 : i32, i32
  }
  func.func @transform_1(%arg0: i32) -> (i32, i32) {
    %c0_i32 = arith.constant 0 : i32
    %c0_i32_0 = arith.constant 0 : i32
    %c0_i32_1 = arith.constant 0 : i32
    return %c0_i32, %c0_i32_0 : i32, i32
  }
  func.func @transform_2(%arg0: i32) -> (i32, i32) {
    %c0_i32 = arith.constant 0 : i32
    %c0_i32_0 = arith.constant 0 : i32
    %c0_i32_1 = arith.constant 0 : i32
    return %c0_i32, %c0_i32_0 : i32, i32
  }
  func.func @transform_3(%arg0: i32) -> (i32, i32, i32) {
    %c0_i32 = arith.constant 0 : i32
    %c0_i32_0 = arith.constant 0 : i32
    %c0_i32_1 = arith.constant 0 : i32
    %c0_i32_2 = arith.constant 0 : i32
    return %c0_i32, %c0_i32_0, %c0_i32_1 : i32, i32, i32
  }
  func.func @transform_4(%arg0: i32) -> (i32, i32) {
    %c0_i32 = arith.constant 0 : i32
    %c0_i32_0 = arith.constant 0 : i32
    return %arg0, %c0_i32 : i32, i32
  }
}

</mosaic_0001>

<llo_original>
// kernel: tpu_custom_call.1
$region0: #{tpu_custom_call.1}
  #allocation0 [shape = 'u32[]', space=smem, size = 0x4, offset = 0x4, fixed_abs, tag = 'smem constant byte address 0x4 - core index']
  #allocation1 [shape = 'u32[144,128]{1,0:T(1,128)}', space=vmem, size = 0x12000, scoped, tag = 'internal scratch']
  %s0 = inlined_call_operand.hbm [shape: f32[8,128], index: 0, kind: input, shape index: {}]
  %s1 = inlined_call_operand.vmem [shape: f32[16,24], index: 1, kind: input, shape index: {}]
  %s2 = inlined_call_operand.vmem [shape: f32[16,56], index: 2, kind: input, shape index: {}]
  %s3 = inlined_call_operand.vmem [shape: f32[2,16,1], index: 3, kind: input, shape index: {}]
  %s4 = inlined_call_operand.hbm [shape: f32[16,128], index: 4, kind: output, shape index: {}]
  %s5 = sld [smem:[#allocation0]]
  $region30: #{tpu_custom_call.1} parent=0
    _
  %s7 = ssub.s32 1, %s5
  %s8 = scalar_select 0, %s7, %s5
  $region1: #{tpu_custom_call.1} parent=0
    #allocation2 [shape = 'u8[4096]{0}', space=vmem, size = 0x1000, scoped, tag = 'input window, operand 0, single buffered']
    #allocation3 [shape = 's32[1]{0}', space=sflag, size = 0x4, scoped, tag = 'scoped memory for tpu_custom_call.1']
    #allocation4 [shape = 's32[1]{0}', space=sflag, size = 0x4, scoped, tag = 'scoped memory for tpu_custom_call.1']
    #allocation5 [shape = 'u8[8192]{0}', space=vmem, size = 0x2000, scoped, tag = 'output window, operand 0, single buffered']
    %9 = vsyncpa [#allocation3], 0
    %10 = vsyncpa [#allocation4], 0
    // Predicated region
    $region2: #{tpu_custom_call.1} parent=1 // pred_check
      _
    $region3: #{tpu_custom_call.1} parent=1 // pred_check_branch
      %12 = sbr.rel (0) target = $region5
    $region4: #{tpu_custom_call.1} parent=1 // pred_region
      %s14 = ssub.s32 128, 128
      %15 = vsyncadd [#allocation3], %s14
      %s17 = sshll.u32 [#allocation2], 4
      %s18 = int_to_ptr.vmem [resolvable:$true] %s17
      %20 = dma.hbm_to_vmem [thread:$0]  %s0, 128, %s18, [#allocation3]
    $region5: #{tpu_custom_call.1} parent=1 // pred_fallthru
      _
    // Predicated region
    $region6: #{tpu_custom_call.1} parent=1 // pred_check
      _
    $region7: #{tpu_custom_call.1} parent=1 // pred_check_branch
      %22 = sbr.rel (0) target = $region9
    $region8: #{tpu_custom_call.1} parent=1 // pred_region
      _
    $region9: #{tpu_custom_call.1} parent=1 // pred_fallthru
      _
    // Predicated region
    $region10: #{tpu_custom_call.1} parent=1 // pred_check
      _
    $region11: #{tpu_custom_call.1} parent=1 // pred_check_branch
      %24 = sbr.rel (0) target = $region13
    $region12: #{tpu_custom_call.1} parent=1 // pred_region
      _
    $region13: #{tpu_custom_call.1} parent=1 // pred_fallthru
      _
    // Predicated region
    $region14: #{tpu_custom_call.1} parent=1 // pred_check
      _
    $region15: #{tpu_custom_call.1} parent=1 // pred_check_branch
      %26 = sbr.rel (0) target = $region17
    $region16: #{tpu_custom_call.1} parent=1 // pred_region
      _
    $region17: #{tpu_custom_call.1} parent=1 // pred_fallthru
      _
    // Predicated region
    $region18: #{tpu_custom_call.1} parent=1 // pred_check
      _
    $region19: #{tpu_custom_call.1} parent=1 // pred_check_branch
      %28 = sbr.rel (0) target = $region21
    $region20: #{tpu_custom_call.1} parent=1 // pred_region
      %29 = dma.done [#allocation3], 128
    $region21: #{tpu_custom_call.1} parent=1 // pred_fallthru
      _
    %v30 = vld [vmem:[#allocation2] sm:$0xff]
    %v31 = vlaneseq
    %v32 = vand.u32 %v31, 127
    %vm33 = vcmp.ne.s32.totalorder %v32, 0
    %vm34 = vcmp.ne.s32.totalorder %v32, 127
    %v35 = vmax.f32 %v30, 0.0
    %36 = vadd.xlane.f32.xlu0 %v35
    %v37 = vpop.xlane.xlu0 %36
    %v38 = vrcp.pop 128.0
    %v39 = vmul.f32 %v37, %v38
    %v40 = vsub.f32 %v35, %v39
    %v41 = vmul.f32 %v40, %v40
    %42 = vadd.xlane.f32.xlu0 %v41
    %v43 = vpop.xlane.xlu0 %42
    %v44 = vmul.f32 %v43, %v38
    %v45 = vadd.f32 %v44, 1e-05
    %v46 = vrsqrt.pop %v45
    %v47 = vmul.f32 %v40, %v46
    %48 = vrot.lane.b32.xlu0 %v47, 1
    %v49 = vpop.permute.xlu0 %48
    %v50 = vsel %vm33, 1, 0
    %vm51 = vcmp.eq.s32.totalorder %v50, 1
    %v52 = vsel %vm51, %v49, 0.0
    %53 = vrot.lane.b32.xlu0 %v47, 127
    %v54 = vpop.permute.xlu0 %53
    %v55 = vsel %vm34, 1, 0
    %vm56 = vcmp.eq.s32.totalorder %v55, 1
    %v57 = vsel %vm56, %v54, 0.0
    %v58 = vld [vmem:[%s1] sm:$0xff]
    %v59 = vld [vmem:[%s1 + $0x8] sm:$0xff]
    %v60 = vld [vmem:[%s3] sm:$0xff]
    %v61 = vld [vmem:[%s3 + $0x8] sm:$0xff]
    %63 = vset.pattern.permute.xlu0 0
    %64 = vperm.xlu0 %63, %v60
    %v65 = vpop.permute.xlu0 %64
    %68 = vset.pattern.permute.xlu0 0
    %69 = vperm.xlu0 %68, %v61
    %v70 = vpop.permute.xlu0 %69
    %vm72 = vcmask 195584
    %v74 = vsel %vm72, %v58, 0
    %v77 = vsel %vm72, %v59, 0
    %79 = vmatprep.subr.mxu0 0.0
    %80 = vmatpush1.msra.mxu0 %v52
    %81 = vmatprep.subr.mxu0 0.0
    %82 = vmatpush1.msra.mxu0 %v47
    %83 = vmatprep.subr.mxu0 0.0
    %84 = vmatpush1.msra.mxu0 %v57
    %85 = vmatprep.subr.mxu0 0.0
    %86 = vmatpush1.msra.mxu0 0.0
    %87 = vmatprep.subr.mxu0 0.0
    %88 = vmatpush1.msra.mxu0 0.0
    %89 = vmatprep.subr.mxu0 0.0
    %90 = vmatpush1.msra.mxu0 0.0
    %91 = vmatprep.subr.mxu0 0.0
    %92 = vmatpush1.msra.mxu0 0.0
    %93 = vmatprep.subr.mxu0 0.0
    %94 = vmatpush1.msra.mxu0 0.0
    %95 = vmatprep.subr.mxu0 0.0
    %96 = vmatpush1.msra.mxu0 0.0
    %97 = vmatprep.subr.mxu0 0.0
    %98 = vmatpush1.msra.mxu0 0.0
    %99 = vmatprep.subr.mxu0 0.0
    %100 = vmatpush1.msra.mxu0 0.0
    %101 = vmatprep.subr.mxu0 0.0
    %102 = vmatpush1.msra.mxu0 0.0
    %103 = vmatprep.subr.mxu0 0.0
    %104 = vmatpush1.msra.mxu0 0.0
    %105 = vmatprep.subr.mxu0 0.0
    %106 = vmatpush1.msra.mxu0 0.0
    %107 = vmatprep.subr.mxu0 0.0
    %108 = vmatpush1.msra.mxu0 0.0
    %109 = vmatprep.subr.mxu0 0.0
    %110 = vmatpush1.msra.mxu0 0.0
    %111 = vmatprep.subr.mxu0 0.0
    %112 = vmatpush1.msra.mxu0 0.0
    %113 = vmatprep.subr.mxu0 0.0
    %114 = vmatpush1.msra.mxu0 0.0
    %115 = vmatprep.subr.mxu0 0.0
    %116 = vmatpush1.msra.mxu0 0.0
    %117 = vmatprep.subr.mxu0 0.0
    %118 = vmatpush1.msra.mxu0 0.0
    %119 = vmatprep.subr.mxu0 0.0
    %120 = vmatpush1.msra.mxu0 0.0
    %121 = vmatprep.subr.mxu0 0.0
    %122 = vmatpush1.msra.mxu0 0.0
    %123 = vmatprep.subr.mxu0 0.0
    %124 = vmatpush1.msra.mxu0 0.0
    %125 = vmatprep.subr.mxu0 0.0
    %126 = vmatpush1.msra.mxu0 0.0
    %127 = vmatprep.subr.mxu0 0.0
    %128 = vmatpush1.msra.mxu0 0.0
    %129 = vmatprep.subr.mxu0 0.0
    %130 = vmatpush1.msra.mxu0 0.0
    %131 = vmatprep.subr.mxu0 0.0
    %132 = vmatpush1.msra.mxu0 0.0
    %133 = vmatprep.subr.mxu0 0.0
    %134 = vmatpush1.msra.mxu0 0.0
    %135 = vmatprep.subr.mxu0 0.0
    %136 = vmatpush1.msra.mxu0 0.0
    %137 = vmatprep.subr.mxu0 0.0
    %138 = vmatpush1.msra.mxu0 0.0
    %139 = vmatprep.subr.mxu0 0.0
    %140 = vmatpush1.msra.mxu0 0.0
    %141 = vmatprep.subr.mxu0 0.0
    %142 = vmatpush1.msra.mxu0 0.0
    %143 = vmatprep.mubr.f32.mxu0 0.0
    %144 = vmatmul.mubr.f32.gmra.mrb[0].mxu0 %v74
    %v145 = vpop.f32.mrb[0].mxu0
    %v146 = vadd.f32 %v65, %v145
    %v147 = vpop.f32.mrb[0].mxu0
    %148 = vmatprep.mubr.f32.mxu0 0.0
    %149 = vmatmul.mubr.f32.gmra.mrb[0].mxu0 %v77
    %v150 = vpop.f32.mrb[0].mxu0
    %v151 = vadd.f32 %v70, %v150
    %v152 = vpop.f32.mrb[0].mxu0
    %153 = vdwg.mxu0
    %v154 = vmax.f32 %v146, 0.0
    %v155 = vmax.f32 %v151, 0.0
    %156 = vadd.xlane.f32.xlu0 %v154
    %v157 = vpop.xlane.xlu0 %156
    %158 = vadd.xlane.f32.xlu0 %v155
    %v159 = vpop.xlane.xlu0 %158
    %v160 = vmul.f32 %v157, %v38
    %v161 = vmul.f32 %v159, %v38
    %v162 = vsub.f32 %v154, %v160
    %v163 = vsub.f32 %v155, %v161
    %v164 = vmul.f32 %v162, %v162
    %v165 = vmul.f32 %v163, %v163
    %166 = vadd.xlane.f32.xlu0 %v164
    %v167 = vpop.xlane.xlu0 %166
    %168 = vadd.xlane.f32.xlu0 %v165
    %v169 = vpop.xlane.xlu0 %168
    %v170 = vmul.f32 %v167, %v38
    %v171 = vmul.f32 %v169, %v38
    %v172 = vadd.f32 %v170, 1e-05
    %v173 = vadd.f32 %v171, 1e-05
    %v174 = vrsqrt.pop %v172
    %v175 = vrsqrt.pop %v173
    %v176 = vmul.f32 %v162, %v174
    %v177 = vmul.f32 %v163, %v175
    %178 = vrot.lane.b32.xlu0 %v176, 1
    %v179 = vpop.permute.xlu0 %178
    %180 = vrot.lane.b32.xlu0 %v177, 1
    %v181 = vpop.permute.xlu0 %180
    %v182 = vsel %vm51, %v179, 0.0
    %v183 = vsel %vm51, %v181, 0.0
    %184 = vrot.lane.b32.xlu0 %v176, 127
    %v185 = vpop.permute.xlu0 %184
    %186 = vrot.lane.b32.xlu0 %v177, 127
    %v187 = vpop.permute.xlu0 %186
    %v188 = vsel %vm56, %v185, 0.0
    %v189 = vsel %vm56, %v187, 0.0
    %v190 = vld [vmem:[%s2] sm:$0xff]
    %v191 = vld [vmem:[%s2 + $0x8] sm:$0xff]
    %s192 = scalar_lea.vmem %s3, 16
    %v193 = vld [vmem:[%s192] sm:$0xff]
    %v194 = vld [vmem:[%s192 + $0x8] sm:$0xff]
    %196 = vset.pattern.permute.xlu0 0
    %197 = vperm.xlu0 %196, %v193
    %v198 = vpop.permute.xlu0 %197
    %201 = vset.pattern.permute.xlu0 0
    %202 = vperm.xlu0 %201, %v194
    %v203 = vpop.permute.xlu0 %202
    %vm205 = vcmask 457728
    %v207 = vsel %vm205, %v190, 0
    %v210 = vsel %vm205, %v191, 0
    %212 = vmatprep.subr.mxu0 0.0
    %213 = vmatpush1.msra.mxu0 %v182
    %214 = vmatprep.subr.mxu0 0.0
    %215 = vmatpush1.msra.mxu0 %v183
    %216 = vmatprep.subr.mxu0 0.0
    %217 = vmatpush1.msra.mxu0 %v176
    %218 = vmatprep.subr.mxu0 0.0
    %219 = vmatpush1.msra.mxu0 %v177
    %220 = vmatprep.subr.mxu0 0.0
    %221 = vmatpush1.msra.mxu0 %v188
    %222 = vmatprep.subr.mxu0 0.0
    %223 = vmatpush1.msra.mxu0 %v189
    %224 = vmatprep.subr.mxu0 0.0
    %225 = vmatpush1.msra.mxu0 %v30
    %226 = vmatprep.subr.mxu0 0.0
    %227 = vmatpush1.msra.mxu0 0.0
    %228 = vmatprep.subr.mxu0 0.0
    %229 = vmatpush1.msra.mxu0 0.0
    %230 = vmatprep.subr.mxu0 0.0
    %231 = vmatpush1.msra.mxu0 0.0
    %232 = vmatprep.subr.mxu0 0.0
    %233 = vmatpush1.msra.mxu0 0.0
    %234 = vmatprep.subr.mxu0 0.0
    %235 = vmatpush1.msra.mxu0 0.0
    %236 = vmatprep.subr.mxu0 0.0
    %237 = vmatpush1.msra.mxu0 0.0
    %238 = vmatprep.subr.mxu0 0.0
    %239 = vmatpush1.msra.mxu0 0.0
    %240 = vmatprep.subr.mxu0 0.0
    %241 = vmatpush1.msra.mxu0 0.0
    %242 = vmatprep.subr.mxu0 0.0
    %243 = vmatpush1.msra.mxu0 0.0
    %244 = vmatprep.subr.mxu0 0.0
    %245 = vmatpush1.msra.mxu0 0.0
    %246 = vmatprep.subr.mxu0 0.0
    %247 = vmatpush1.msra.mxu0 0.0
    %248 = vmatprep.subr.mxu0 0.0
    %249 = vmatpush1.msra.mxu0 0.0
    %250 = vmatprep.subr.mxu0 0.0
    %251 = vmatpush1.msra.mxu0 0.0
    %252 = vmatprep.subr.mxu0 0.0
    %253 = vmatpush1.msra.mxu0 0.0
    %254 = vmatprep.subr.mxu0 0.0
    %255 = vmatpush1.msra.mxu0 0.0
    %256 = vmatprep.subr.mxu0 0.0
    %257 = vmatpush1.msra.mxu0 0.0
    %258 = vmatprep.subr.mxu0 0.0
    %259 = vmatpush1.msra.mxu0 0.0
    %260 = vmatprep.subr.mxu0 0.0
    %261 = vmatpush1.msra.mxu0 0.0
    %262 = vmatprep.subr.mxu0 0.0
    %263 = vmatpush1.msra.mxu0 0.0
    %264 = vmatprep.subr.mxu0 0.0
    %265 = vmatpush1.msra.mxu0 0.0
    %266 = vmatprep.subr.mxu0 0.0
    %267 = vmatpush1.msra.mxu0 0.0
    %268 = vmatprep.subr.mxu0 0.0
    %269 = vmatpush1.msra.mxu0 0.0
    %270 = vmatprep.subr.mxu0 0.0
    %271 = vmatpush1.msra.mxu0 0.0
    %272 = vmatprep.subr.mxu0 0.0
    %273 = vmatpush1.msra.mxu0 0.0
    %274 = vmatprep.subr.mxu0 0.0
    %275 = vmatpush1.msra.mxu0 0.0
    %276 = vmatprep.mubr.f32.mxu0 0.0
    %277 = vmatmul.mubr.f32.gmra.mrb[0].mxu0 %v207
    %v278 = vpop.f32.mrb[0].mxu0
    %v279 = vadd.f32 %v198, %v278
    %v280 = vpop.f32.mrb[0].mxu0
    %281 = vmatprep.mubr.f32.mxu0 0.0
    %282 = vmatmul.mubr.f32.gmra.mrb[0].mxu0 %v210
    %v283 = vpop.f32.mrb[0].mxu0
    %v284 = vadd.f32 %v203, %v283
    %v285 = vpop.f32.mrb[0].mxu0
    %286 = vdwg.mxu0
    %287 = vst [vmem:[#allocation5] sm:$0xff] %v279
    %288 = vst [vmem:[#allocation5 + $0x8] sm:$0xff] %v284
    // Predicated region
    $region22: #{tpu_custom_call.1} parent=1 // pred_check
      _
    $region23: #{tpu_custom_call.1} parent=1 // pred_check_branch
      %290 = sbr.rel (0) target = $region25
    $region24: #{tpu_custom_call.1} parent=1 // pred_region
      %s292 = ssub.s32 256, 256
      %293 = vsyncadd [#allocation4], %s292
      %s294 = sshll.u32 [#allocation5], 4
      %s295 = int_to_ptr.vmem [resolvable:$true] %s294
      %300 = dma.vmem_to_hbm [thread:$0]  %s295, 256, %s4, [#allocation4], 128, 128, 8
    $region25: #{tpu_custom_call.1} parent=1 // pred_fallthru
      _
    // Predicated region
    $region26: #{tpu_custom_call.1} parent=1 // pred_check
      _
    $region27: #{tpu_custom_call.1} parent=1 // pred_check_branch
      %302 = sbr.rel (0) target = $region29
    $region28: #{tpu_custom_call.1} parent=1 // pred_region
      %303 = dma.done [#allocation4], 256
    $region29: #{tpu_custom_call.1} parent=1 // pred_fallthru
      _
    %304 = vsyncpa [#allocation3], 1
    %305 = vsyncpa [#allocation4], 1

</llo_original>
